<compile_context>
chip_gen: v5e
topology: v5e:2x2
jax: 0.10.0
libtpu: 0.0.40
codegen_flags: <defaults>
</compile_context>

<pallas_src>
import functools
import math

import jax
import jax.numpy as jnp
from jax.experimental import pallas as pl
from jax.experimental.pallas import tpu as pltpu


def _round_up(x, m):
    return ((x + m - 1) // m) * m


def _pad2d(a, rows, cols):
    r, c = a.shape
    return jnp.pad(a, ((0, rows - r), (0, cols - c)))


# ------------------------------ fused kernel ------------------------------

def _make_liseq_kernel(num_layers):
    def kernel(x_ref, src_ref, *rest):
        w_refs = rest[:4 * num_layers]
        out_ref = rest[4 * num_layers]
        cdt = w_refs[0].dtype                      # matmul compute dtype
        src_c = src_ref[...].astype(cdt)           # hoisted: cast src once
        out = x_ref[...].astype(jnp.float32)
        for l in range(num_layers):                # static unroll over layers
            wtT = w_refs[4 * l]                    # (Opad, Fin_pad)
            bt = w_refs[4 * l + 1]                 # (1, Fin_pad)   f32
            wT = w_refs[4 * l + 2]                 # (Fin_pad, Fout_pad)
            b = w_refs[4 * l + 3]                  # (1, Fout_pad)  f32
            t_src = jnp.dot(src_c, wtT[...],
                            preferred_element_type=jnp.float32) + bt[...]
            ti = out * t_src                       # f32 gate
            out = jnp.dot(ti.astype(cdt), wT[...],
                          preferred_element_type=jnp.float32) + b[...]
        out_ref[...] = out.astype(out_ref.dtype)
    return kernel


# ------------------- one-time parameter prep (hoisted) --------------------

def prepare_liseq_params(layer_params, compute_dtype=jnp.float32):
    """Transpose, 128-pad and cast the per-layer weights ONCE, outside the
    forward call path.  Padded lanes are zero, so the gate and the second
    matmul never pick up garbage from padding."""
    prepped = []
    for p in layer_params:
        out_f, in_f = p["weight"].shape
        in_f2, origin = p["trans_src_w"].shape
        assert in_f2 == in_f
        o_pad = _round_up(origin, 128)
        in_pad = _round_up(in_f, 128)
        out_pad = _round_up(out_f, 128)
        prepped.append(dict(
            wtT=_pad2d(p["trans_src_w"].T, o_pad, in_pad).astype(compute_dtype),
            bt=_pad2d(p["trans_src_b"][None, :].astype(jnp.float32), 1, in_pad),
            wT=_pad2d(p["weight"].T, in_pad, out_pad).astype(compute_dtype),
            b=_pad2d(p["bias"][None, :].astype(jnp.float32), 1, out_pad),
        ))
    return tuple(prepped)


# ------------------------------ fused forward -----------------------------

@functools.partial(jax.jit, static_argnames=("out_features", "tile_n"))
def _liseq_fused(x, src, prepped, *, out_features, tile_n=256):
    n, f0 = x.shape
    num_layers = len(prepped)
    o_pad, f0_pad = prepped[0]["wtT"].shape
    fl_pad = prepped[-1]["wT"].shape[1]

    eff_tile = min(_round_up(tile_n, 8), _round_up(n, 8))
    n_pad = _round_up(n, eff_tile)
    grid_n = n_pad // eff_tile

    x_p = jnp.zeros((n_pad, f0_pad), jnp.float32).at[:n, :f0].set(
        x.astype(jnp.float32))
    src_p = jnp.zeros((n_pad, o_pad), jnp.float32).at[:n, :src.shape[1]].set(
        src.astype(jnp.float32))

    w_args, w_specs = [], []
    for p in prepped:
        for key in ("wtT", "bt", "wT", "b"):
            a = p[key]
            w_args.append(a)
            # Full-array block, same block index every grid step -> loaded
            # once, stays resident in VMEM across the whole grid.
            w_specs.append(pl.BlockSpec(a.shape, lambda i: (0, 0)))

    in_specs = [
        pl.BlockSpec((eff_tile, f0_pad), lambda i: (i, 0)),   # x tile
        pl.BlockSpec((eff_tile, o_pad), lambda i: (i, 0)),    # src tile
    ] + w_specs
    out_spec = pl.BlockSpec((eff_tile, fl_pad), lambda i: (i, 0))

    # Advisory cost estimate (both matmuls + gate, all HBM bytes).
    flops = 0
    bytes_accessed = x_p.size * 4 + src_p.size * 4 + n_pad * fl_pad * 4
    for p in prepped:
        o, fi = p["wtT"].shape
        fo = p["wT"].shape[1]
        flops += 2 * n_pad * (o * fi + fi * fo) + n_pad * fi
        bytes_accessed += sum(int(a.size) * a.dtype.itemsize
                              for a in (p["wtT"], p["bt"], p["wT"], p["b"]))

    # VMEM budget: resident weights + double-buffered x/src/out tiles + slack.
    # Clamp to 48 MiB so the same tiling also fits v7x's 64 MiB VMEM.
    w_bytes = sum(int(a.size) * a.dtype.itemsize for a in w_args)
    tile_bytes = 4 * eff_tile * (f0_pad + o_pad + fl_pad)
    vmem_limit = int(min(max(4 * (w_bytes + 2 * tile_bytes), 32 << 20), 48 << 20))

    out_p = pl.pallas_call(
        _make_liseq_kernel(num_layers),
        out_shape=jax.ShapeDtypeStruct((n_pad, fl_pad), jnp.float32),
        grid_spec=pltpu.PrefetchScalarGridSpec(
            num_scalar_prefetch=0,
            grid=(grid_n,),
            in_specs=in_specs,
            out_specs=out_spec,
        ),
        compiler_params=pltpu.CompilerParams(
            dimension_semantics=("parallel",),
            vmem_limit_bytes=vmem_limit,
        ),
        cost_estimate=pl.CostEstimate(
            flops=int(flops), transcendentals=0,
            bytes_accessed=int(bytes_accessed)),
    )(x_p, src_p, *w_args)

    return out_p[:n, :out_features]


def liseq_forward(x, src, prepped, out_features, tile_n=256):
    """LISeq.forward: fused LILinear chain (dropout=identity in eval)."""
    return _liseq_fused(x, src, prepped,
                        out_features=out_features, tile_n=tile_n)


# -------------------- deterministic parameter init ------------------------

def _kaiming_uniform(key, shape, fan_in):
    # matches torch kaiming_uniform_(a=sqrt(5)): bound = 1/sqrt(fan_in)
    bound = 1.0 / math.sqrt(fan_in) if fan_in > 0 else 0.0
    return jax.random.uniform(key, shape, jnp.float32, -bound, bound)


def init_lilinear(key, in_features, out_features, origin_infeat):
    k = jax.random.split(key, 6)
    return {
        "weight": _kaiming_uniform(k[0], (out_features, in_features), in_features),
        # w_src is declared in __init__ but unused in forward; kept for parity.
        "w_src": _kaiming_uniform(k[1], (in_features, 1), 1),
        "bias": _kaiming_uniform(k[2], (out_features,), in_features),
        "trans_src_w": _kaiming_uniform(k[3], (in_features, origin_infeat), origin_infeat),
        "trans_src_b": _kaiming_uniform(k[4], (in_features,), origin_infeat),
    }


# -------------------- pure-JAX reference for checking ----------------------

def liseq_reference(x, src, layer_params):
    out = x
    for p in layer_params:
        t_src = src @ p["trans_src_w"].T + p["trans_src_b"]
        ti = out * t_src
        out = ti @ p["weight"].T + p["bias"]
    return out


if __name__ == "__main__":
    key = jax.random.PRNGKey(0)
    kx, ksrc, k1, k2 = jax.random.split(key, 4)

    # Small shapes implied by the module; N chosen so the row grid has >1 tile.
    N = 200
    origin_infeat = 16
    f0, f1, f2 = 32, 64, 16   # LILinear(32->64) -> Dropout(eval) -> LILinear(64->16)

    x = jax.random.normal(kx, (N, f0), jnp.float32)
    src = jax.random.normal(ksrc, (N, origin_infeat), jnp.float32)

    layer_params = [
        init_lilinear(k1, f0, f1, origin_infeat),
        init_lilinear(k2, f1, f2, origin_infeat),
    ]
    ref = liseq_reference(x, src, layer_params)

    # f32 matmul path (exact parity with the reference).
    prepped_f32 = prepare_liseq_params(layer_params, jnp.float32)
    out_f32 = jax.block_until_ready(
        liseq_forward(x, src, prepped_f32, f2, tile_n=128))
    assert out_f32.shape == (N, f2), out_f32.shape
    assert jnp.allclose(out_f32, ref, atol=1e-4, rtol=1e-4), "f32 mismatch"

    # bf16 matmul path (v6e/v7x MXU datapath; f32 accumulation + f32 gate/bias).
    prepped_bf16 = prepare_liseq_params(layer_params, jnp.bfloat16)
    out_bf16 = jax.block_until_ready(
        liseq_forward(x, src, prepped_bf16, f2, tile_n=128))
    assert out_bf16.shape == (N, f2), out_bf16.shape
    assert jnp.allclose(out_bf16, ref, atol=5e-2, rtol=5e-2), "bf16 mismatch"

    print("KERNEL_OK")
</pallas_src>

<mosaic_0001>
module attributes {stable_mosaic.version = 11 : i64} {
  func.func @kernel(%arg0: i32, %arg1: memref<128x128xf32, #tpu.memory_space<vmem>>, %arg2: memref<128x128xf32, #tpu.memory_space<vmem>>, %arg3: memref<128x128xf32, #tpu.memory_space<vmem>>, %arg4: memref<1x128xf32, #tpu.memory_space<vmem>>, %arg5: memref<128x128xf32, #tpu.memory_space<vmem>>, %arg6: memref<1x128xf32, #tpu.memory_space<vmem>>, %arg7: memref<128x128xf32, #tpu.memory_space<vmem>>, %arg8: memref<1x128xf32, #tpu.memory_space<vmem>>, %arg9: memref<128x128xf32, #tpu.memory_space<vmem>>, %arg10: memref<1x128xf32, #tpu.memory_space<vmem>>, %arg11: memref<128x128xf32, #tpu.memory_space<vmem>>) attributes {dimension_semantics = [#tpu.dimension_semantics<parallel>], iteration_bounds = array<i64: 2>, scalar_prefetch = 0 : i64, scratch_operands = 0 : i64, tpu.core_type = #tpu.core_type<tc>, window_params = [{transform_indices = @transform_0, window_bounds = array<i64: 128, 128>}, {transform_indices = @transform_1, window_bounds = array<i64: 128, 128>}, {pipeline_mode = #tpu.pipeline_mode<synchronous>, transform_indices = @transform_2, window_bounds = array<i64: 128, 128>}, {pipeline_mode = #tpu.pipeline_mode<synchronous>, transform_indices = @transform_3, window_bounds = array<i64: 1, 128>}, {pipeline_mode = #tpu.pipeline_mode<synchronous>, transform_indices = @transform_4, window_bounds = array<i64: 128, 128>}, {pipeline_mode = #tpu.pipeline_mode<synchronous>, transform_indices = @transform_5, window_bounds = array<i64: 1, 128>}, {pipeline_mode = #tpu.pipeline_mode<synchronous>, transform_indices = @transform_6, window_bounds = array<i64: 128, 128>}, {pipeline_mode = #tpu.pipeline_mode<synchronous>, transform_indices = @transform_7, window_bounds = array<i64: 1, 128>}, {pipeline_mode = #tpu.pipeline_mode<synchronous>, transform_indices = @transform_8, window_bounds = array<i64: 128, 128>}, {pipeline_mode = #tpu.pipeline_mode<synchronous>, transform_indices = @transform_9, window_bounds = array<i64: 1, 128>}, {transform_indices = @transform_10, window_bounds = array<i64: 128, 128>}]} {
    %c0 = arith.constant 0 : index
    %c0_0 = arith.constant 0 : index
    %0 = vector.load %arg2[%c0, %c0_0] : memref<128x128xf32, #tpu.memory_space<vmem>>, vector<128x128xf32>
    %c0_1 = arith.constant 0 : index
    %c0_2 = arith.constant 0 : index
    %1 = vector.load %arg1[%c0_1, %c0_2] : memref<128x128xf32, #tpu.memory_space<vmem>>, vector<128x128xf32>
    %c0_3 = arith.constant 0 : index
    %c0_4 = arith.constant 0 : index
    %2 = vector.load %arg3[%c0_3, %c0_4] : memref<128x128xf32, #tpu.memory_space<vmem>>, vector<128x128xf32>
    %cst = arith.constant dense<0.000000e+00> : vector<128x128xf32>
    %3 = tpu.matmul %0, %2, %cst {dimension_numbers = #tpu.dot_dimension_numbers<[1], [0], [0], [1], [0, 0, 1, 1], [], []>} : vector<128x128xf32>, vector<128x128xf32>, vector<128x128xf32> -> vector<128x128xf32>
    %c0_5 = arith.constant 0 : index
    %c0_6 = arith.constant 0 : index
    %4 = vector.load %arg4[%c0_5, %c0_6] : memref<1x128xf32, #tpu.memory_space<vmem>>, vector<1x128xf32>
    %5 = vector.broadcast %4 : vector<1x128xf32> to vector<128x128xf32>
    %6 = arith.addf %3, %5 : vector<128x128xf32>
    %7 = arith.mulf %1, %6 : vector<128x128xf32>
    %c0_7 = arith.constant 0 : index
    %c0_8 = arith.constant 0 : index
    %8 = vector.load %arg5[%c0_7, %c0_8] : memref<128x128xf32, #tpu.memory_space<vmem>>, vector<128x128xf32>
    %cst_9 = arith.constant dense<0.000000e+00> : vector<128x128xf32>
    %9 = tpu.matmul %7, %8, %cst_9 {dimension_numbers = #tpu.dot_dimension_numbers<[1], [0], [0], [1], [0, 0, 1, 1], [], []>} : vector<128x128xf32>, vector<128x128xf32>, vector<128x128xf32> -> vector<128x128xf32>
    %c0_10 = arith.constant 0 : index
    %c0_11 = arith.constant 0 : index
    %10 = vector.load %arg6[%c0_10, %c0_11] : memref<1x128xf32, #tpu.memory_space<vmem>>, vector<1x128xf32>
    %11 = vector.broadcast %10 : vector<1x128xf32> to vector<128x128xf32>
    %12 = arith.addf %9, %11 : vector<128x128xf32>
    %c0_12 = arith.constant 0 : index
    %c0_13 = arith.constant 0 : index
    %13 = vector.load %arg7[%c0_12, %c0_13] : memref<128x128xf32, #tpu.memory_space<vmem>>, vector<128x128xf32>
    %cst_14 = arith.constant dense<0.000000e+00> : vector<128x128xf32>
    %14 = tpu.matmul %0, %13, %cst_14 {dimension_numbers = #tpu.dot_dimension_numbers<[1], [0], [0], [1], [0, 0, 1, 1], [], []>} : vector<128x128xf32>, vector<128x128xf32>, vector<128x128xf32> -> vector<128x128xf32>
    %c0_15 = arith.constant 0 : index
    %c0_16 = arith.constant 0 : index
    %15 = vector.load %arg8[%c0_15, %c0_16] : memref<1x128xf32, #tpu.memory_space<vmem>>, vector<1x128xf32>
    %16 = vector.broadcast %15 : vector<1x128xf32> to vector<128x128xf32>
    %17 = arith.addf %14, %16 : vector<128x128xf32>
    %18 = arith.mulf %12, %17 : vector<128x128xf32>
    %c0_17 = arith.constant 0 : index
    %c0_18 = arith.constant 0 : index
    %19 = vector.load %arg9[%c0_17, %c0_18] : memref<128x128xf32, #tpu.memory_space<vmem>>, vector<128x128xf32>
    %cst_19 = arith.constant dense<0.000000e+00> : vector<128x128xf32>
    %20 = tpu.matmul %18, %19, %cst_19 {dimension_numbers = #tpu.dot_dimension_numbers<[1], [0], [0], [1], [0, 0, 1, 1], [], []>} : vector<128x128xf32>, vector<128x128xf32>, vector<128x128xf32> -> vector<128x128xf32>
    %c0_20 = arith.constant 0 : index
    %c0_21 = arith.constant 0 : index
    %21 = vector.load %arg10[%c0_20, %c0_21] : memref<1x128xf32, #tpu.memory_space<vmem>>, vector<1x128xf32>
    %22 = vector.broadcast %21 : vector<1x128xf32> to vector<128x128xf32>
    %23 = arith.addf %20, %22 : vector<128x128xf32>
    %c0_22 = arith.constant 0 : index
    %c0_23 = arith.constant 0 : index
    %24 = vector.load %arg11[%c0_22, %c0_23] : memref<128x128xf32, #tpu.memory_space<vmem>>, vector<128x128xf32>
    tpu.vector_store %arg11[%c0_22, %c0_23], %23 {strides = array<i32>} : memref<128x128xf32, #tpu.memory_space<vmem>>, vector<128x128xf32>,
    return
  }
  func.func @transform_0(%arg0: i32) -> (i32, i32) {
    %c0_i32 = arith.constant 0 : i32
    %c0_i32_0 = arith.constant 0 : i32
    return %arg0, %c0_i32 : i32, i32
  }
  func.func @transform_1(%arg0: i32) -> (i32, i32) {
    %c0_i32 = arith.constant 0 : i32
    %c0_i32_0 = arith.constant 0 : i32
    return %arg0, %c0_i32 : i32, i32
  }
  func.func @transform_2(%arg0: i32) -> (i32, i32) {
    %c0_i32 = arith.constant 0 : i32
    %c0_i32_0 = arith.constant 0 : i32
    %c0_i32_1 = arith.constant 0 : i32
    return %c0_i32, %c0_i32_0 : i32, i32
  }
  func.func @transform_3(%arg0: i32) -> (i32, i32) {
    %c0_i32 = arith.constant 0 : i32
    %c0_i32_0 = arith.constant 0 : i32
    %c0_i32_1 = arith.constant 0 : i32
    return %c0_i32, %c0_i32_0 : i32, i32
  }
  func.func @transform_4(%arg0: i32) -> (i32, i32) {
    %c0_i32 = arith.constant 0 : i32
    %c0_i32_0 = arith.constant 0 : i32
    %c0_i32_1 = arith.constant 0 : i32
    return %c0_i32, %c0_i32_0 : i32, i32
  }
  func.func @transform_5(%arg0: i32) -> (i32, i32) {
    %c0_i32 = arith.constant 0 : i32
    %c0_i32_0 = arith.constant 0 : i32
    %c0_i32_1 = arith.constant 0 : i32
    return %c0_i32, %c0_i32_0 : i32, i32
  }
  func.func @transform_6(%arg0: i32) -> (i32, i32) {
    %c0_i32 = arith.constant 0 : i32
    %c0_i32_0 = arith.constant 0 : i32
    %c0_i32_1 = arith.constant 0 : i32
    return %c0_i32, %c0_i32_0 : i32, i32
  }
  func.func @transform_7(%arg0: i32) -> (i32, i32) {
    %c0_i32 = arith.constant 0 : i32
    %c0_i32_0 = arith.constant 0 : i32
    %c0_i32_1 = arith.constant 0 : i32
    return %c0_i32, %c0_i32_0 : i32, i32
  }
  func.func @transform_8(%arg0: i32) -> (i32, i32) {
    %c0_i32 = arith.constant 0 : i32
    %c0_i32_0 = arith.constant 0 : i32
    %c0_i32_1 = arith.constant 0 : i32
    return %c0_i32, %c0_i32_0 : i32, i32
  }
  func.func @transform_9(%arg0: i32) -> (i32, i32) {
    %c0_i32 = arith.constant 0 : i32
    %c0_i32_0 = arith.constant 0 : i32
    %c0_i32_1 = arith.constant 0 : i32
    return %c0_i32, %c0_i32_0 : i32, i32
  }
  func.func @transform_10(%arg0: i32) -> (i32, i32) {
    %c0_i32 = arith.constant 0 : i32
    %c0_i32_0 = arith.constant 0 : i32
    return %arg0, %c0_i32 : i32, i32
  }
}

</mosaic_0001>

<llo_original>
// kernel: _liseq_fused.1
$region0: #{_liseq_fused.1}
  #allocation0 [shape = 'u32[]', space=smem, size = 0x4, offset = 0x4, fixed_abs, tag = 'smem constant byte address 0x4 - core index']
  #allocation1 [shape = 'u32[72,128]{1,0:T(1,128)}', space=vmem, size = 0x9000, scoped, tag = 'internal scratch']
  %s0 = inlined_call_operand.vmem [shape: f32[256,128], index: 0, kind: input, shape index: {}]
  %s1 = inlined_call_operand.vmem [shape: f32[256,128], index: 1, kind: input, shape index: {}]
  %s2 = inlined_call_operand.vmem [shape: f32[128,128], index: 2, kind: input, shape index: {}]
  %s3 = inlined_call_operand.vmem [shape: f32[1,128], index: 3, kind: input, shape index: {}]
  %s4 = inlined_call_operand.vmem [shape: f32[128,128], index: 4, kind: input, shape index: {}]
  %s5 = inlined_call_operand.vmem [shape: f32[1,128], index: 5, kind: input, shape index: {}]
  %s6 = inlined_call_operand.vmem [shape: f32[128,128], index: 6, kind: input, shape index: {}]
  %s7 = inlined_call_operand.vmem [shape: f32[1,128], index: 7, kind: input, shape index: {}]
  %s8 = inlined_call_operand.vmem [shape: f32[128,128], index: 8, kind: input, shape index: {}]
  %s9 = inlined_call_operand.vmem [shape: f32[1,128], index: 9, kind: input, shape index: {}]
  %s10 = inlined_call_operand.vmem [shape: f32[256,128], index: 10, kind: output, shape index: {}]
  %s11 = sld [smem:[#allocation0]]
  $region73: #{_liseq_fused.1} parent=0
    _
  %s13 = ssub.s32 1, %s11
  %s14 = scalar_select 0, %s13, %s11
  loop: start=0, step=1, limit=4
  $region2: #{_liseq_fused.1} parent=0 // loop_pre_header
    _
  $region3: #{_liseq_fused.1} parent=0 // loop_header
    %s16 = sphi 0, %s20
    %p17 = scmp.ge.s32.totalorder %s16, 4
    %s26 = sphi 0, %s28
    %s29 = sphi 0, %s26
    %s30 = sphi 0, %s29
    %s46 = sphi 0, %s30
    %s52 = sphi 0, %s54
    %s55 = sphi 0, %s52
    %s56 = sphi 0, %s55
    %s72 = sphi 0, %s56
    %s76 = sphi 0, %s76
    %s78 = sphi 0, %s76
    %s79 = sphi 0, %s78
    %s93 = sphi 0, %s79
    %s97 = sphi 0, %s97
    %s99 = sphi 0, %s97
    %s100 = sphi 0, %s99
    %s114 = sphi 0, %s100
    %s118 = sphi 0, %s118
    %s120 = sphi 0, %s118
    %s121 = sphi 0, %s120
    %s135 = sphi 0, %s121
    %s139 = sphi 0, %s139
    %s141 = sphi 0, %s139
    %s142 = sphi 0, %s141
    %s156 = sphi 0, %s142
    %s160 = sphi 0, %s160
    %s162 = sphi 0, %s160
    %s163 = sphi 0, %s162
    %s177 = sphi 0, %s163
    %s181 = sphi 0, %s181
    %s183 = sphi 0, %s181
    %s184 = sphi 0, %s183
    %s198 = sphi 0, %s184
    %s202 = sphi 0, %s202
    %s204 = sphi 0, %s202
    %s205 = sphi 0, %s204
    %s219 = sphi 0, %s205
    %s223 = sphi 0, %s223
    %s225 = sphi 0, %s223
    %s226 = sphi 0, %s225
    %s240 = sphi 0, %s226
    %s246 = sphi 0, %s248
    %s249 = sphi 0, %s246
    %s250 = sphi 0, %s249
    %s266 = sphi 0, %s250
  $region4: #{_liseq_fused.1} parent=0 // loop_header_branch
    %19 = sbr.rel (%p17) target = $region8
  $region5: #{_liseq_fused.1} parent=0 // loop_body
    %s21 = ssub.s32 %s16, 1
    %s22 = ssub.s32 %s16, 2
    %s23 = sadd.s32 %s16, 1
    %s24 = ssub.s32 %s16, %s23
    %p25 = scmp.eq.s32.totalorder %s24, 0
    %s27 = sadd.s32 %s26, 1
    %s28 = scalar_select %p25, %s26, %s27
    %p31 = pneg %p25
    %p32 = scmp.eq.s32.totalorder %s16, 1
    %p33 = por %p31, %p32
    %p34 = scmp.ne.s32.totalorder %s26, %s29
    %p35 = scmp.eq.s32.totalorder %s16, 0
    %p36 = por %p34, %p35
    %p37 = scmp.ne.s32.totalorder %s26, %s29
    %p38 = scmp.eq.s32.totalorder %s21, 1
    %p39 = por %p37, %p38
    %p40 = scmp.ne.s32.totalorder %s29, %s30
    %p41 = scmp.eq.s32.totalorder %s21, 0
    %p42 = por %p40, %p41
    %p43 = scmp.ne.s32.totalorder %s29, %s30
    %p44 = scmp.eq.s32.totalorder %s22, 1
    %p45 = por %p43, %p44
    %p47 = scmp.ne.s32.totalorder %s30, %s46
    %p48 = scmp.eq.s32.totalorder %s22, 0
    %p49 = por %p47, %p48
    %s50 = ssub.s32 %s16, %s23
    %p51 = scmp.eq.s32.totalorder %s50, 0
    %s53 = sadd.s32 %s52, 1
    %s54 = scalar_select %p51, %s52, %s53
    %p57 = pneg %p51
    %p58 = scmp.eq.s32.totalorder %s16, 1
    %p59 = por %p57, %p58
    %p60 = scmp.ne.s32.totalorder %s52, %s55
    %p61 = scmp.eq.s32.totalorder %s16, 0
    %p62 = por %p60, %p61
    %p63 = scmp.ne.s32.totalorder %s52, %s55
    %p64 = scmp.eq.s32.totalorder %s21, 1
    %p65 = por %p63, %p64
    %p66 = scmp.ne.s32.totalorder %s55, %s56
    %p67 = scmp.eq.s32.totalorder %s21, 0
    %p68 = por %p66, %p67
    %p69 = scmp.ne.s32.totalorder %s55, %s56
    %p70 = scmp.eq.s32.totalorder %s22, 1
    %p71 = por %p69, %p70
    %p73 = scmp.ne.s32.totalorder %s56, %s72
    %p74 = scmp.eq.s32.totalorder %s22, 0
    %p75 = por %p73, %p74
    %s77 = sadd.s32 %s76, 1
    %p80 = scmp.eq.s32.totalorder %s16, 1
    %p81 = scmp.ne.s32.totalorder %s76, %s78
    %p82 = scmp.eq.s32.totalorder %s16, 0
    %p83 = por %p81, %p82
    %p84 = scmp.ne.s32.totalorder %s76, %s78
    %p85 = scmp.eq.s32.totalorder %s21, 1
    %p86 = por %p84, %p85
    %p87 = scmp.ne.s32.totalorder %s78, %s79
    %p88 = scmp.eq.s32.totalorder %s21, 0
    %p89 = por %p87, %p88
    %p90 = scmp.ne.s32.totalorder %s78, %s79
    %p91 = scmp.eq.s32.totalorder %s22, 1
    %p92 = por %p90, %p91
    %p94 = scmp.ne.s32.totalorder %s79, %s93
    %p95 = scmp.eq.s32.totalorder %s22, 0
    %p96 = por %p94, %p95
    %s98 = sadd.s32 %s97, 1
    %p101 = scmp.eq.s32.totalorder %s16, 1
    %p102 = scmp.ne.s32.totalorder %s97, %s99
    %p103 = scmp.eq.s32.totalorder %s16, 0
    %p104 = por %p102, %p103
    %p105 = scmp.ne.s32.totalorder %s97, %s99
    %p106 = scmp.eq.s32.totalorder %s21, 1
    %p107 = por %p105, %p106
    %p108 = scmp.ne.s32.totalorder %s99, %s100
    %p109 = scmp.eq.s32.totalorder %s21, 0
    %p110 = por %p108, %p109
    %p111 = scmp.ne.s32.totalorder %s99, %s100
    %p112 = scmp.eq.s32.totalorder %s22, 1
    %p113 = por %p111, %p112
    %p115 = scmp.ne.s32.totalorder %s100, %s114
    %p116 = scmp.eq.s32.totalorder %s22, 0
    %p117 = por %p115, %p116
    %s119 = sadd.s32 %s118, 1
    %p122 = scmp.eq.s32.totalorder %s16, 1
    %p123 = scmp.ne.s32.totalorder %s118, %s120
    %p124 = scmp.eq.s32.totalorder %s16, 0
    %p125 = por %p123, %p124
    %p126 = scmp.ne.s32.totalorder %s118, %s120
    %p127 = scmp.eq.s32.totalorder %s21, 1
    %p128 = por %p126, %p127
    %p129 = scmp.ne.s32.totalorder %s120, %s121
    %p130 = scmp.eq.s32.totalorder %s21, 0
    %p131 = por %p129, %p130
    %p132 = scmp.ne.s32.totalorder %s120, %s121
    %p133 = scmp.eq.s32.totalorder %s22, 1
    %p134 = por %p132, %p133
    %p136 = scmp.ne.s32.totalorder %s121, %s135
    %p137 = scmp.eq.s32.totalorder %s22, 0
    %p138 = por %p136, %p137
    %s140 = sadd.s32 %s139, 1
    %p143 = scmp.eq.s32.totalorder %s16, 1
    %p144 = scmp.ne.s32.totalorder %s139, %s141
    %p145 = scmp.eq.s32.totalorder %s16, 0
    %p146 = por %p144, %p145
    %p147 = scmp.ne.s32.totalorder %s139, %s141
    %p148 = scmp.eq.s32.totalorder %s21, 1
    %p149 = por %p147, %p148
    %p150 = scmp.ne.s32.totalorder %s141, %s142
    %p151 = scmp.eq.s32.totalorder %s21, 0
    %p152 = por %p150, %p151
    %p153 = scmp.ne.s32.totalorder %s141, %s142
    %p154 = scmp.eq.s32.totalorder %s22, 1
    %p155 = por %p153, %p154
    %p157 = scmp.ne.s32.totalorder %s142, %s156
    %p158 = scmp.eq.s32.totalorder %s22, 0
    %p159 = por %p157, %p158
    %s161 = sadd.s32 %s160, 1
    %p164 = scmp.eq.s32.totalorder %s16, 1
    %p165 = scmp.ne.s32.totalorder %s160, %s162
    %p166 = scmp.eq.s32.totalorder %s16, 0
    %p167 = por %p165, %p166
    %p168 = scmp.ne.s32.totalorder %s160, %s162
    %p169 = scmp.eq.s32.totalorder %s21, 1
    %p170 = por %p168, %p169
    %p171 = scmp.ne.s32.totalorder %s162, %s163
    %p172 = scmp.eq.s32.totalorder %s21, 0
    %p173 = por %p171, %p172
    %p174 = scmp.ne.s32.totalorder %s162, %s163
    %p175 = scmp.eq.s32.totalorder %s22, 1
    %p176 = por %p174, %p175
    %p178 = scmp.ne.s32.totalorder %s163, %s177
    %p179 = scmp.eq.s32.totalorder %s22, 0
    %p180 = por %p178, %p179
    %s182 = sadd.s32 %s181, 1
    %p185 = scmp.eq.s32.totalorder %s16, 1
    %p186 = scmp.ne.s32.totalorder %s181, %s183
    %p187 = scmp.eq.s32.totalorder %s16, 0
    %p188 = por %p186, %p187
    %p189 = scmp.ne.s32.totalorder %s181, %s183
    %p190 = scmp.eq.s32.totalorder %s21, 1
    %p191 = por %p189, %p190
    %p192 = scmp.ne.s32.totalorder %s183, %s184
    %p193 = scmp.eq.s32.totalorder %s21, 0
    %p194 = por %p192, %p193
    %p195 = scmp.ne.s32.totalorder %s183, %s184
    %p196 = scmp.eq.s32.totalorder %s22, 1
    %p197 = por %p195, %p196
    %p199 = scmp.ne.s32.totalorder %s184, %s198
    %p200 = scmp.eq.s32.totalorder %s22, 0
    %p201 = por %p199, %p200
    %s203 = sadd.s32 %s202, 1
    %p206 = scmp.eq.s32.totalorder %s16, 1
    %p207 = scmp.ne.s32.totalorder %s202, %s204
    %p208 = scmp.eq.s32.totalorder %s16, 0
    %p209 = por %p207, %p208
    %p210 = scmp.ne.s32.totalorder %s202, %s204
    %p211 = scmp.eq.s32.totalorder %s21, 1
    %p212 = por %p210, %p211
    %p213 = scmp.ne.s32.totalorder %s204, %s205
    %p214 = scmp.eq.s32.totalorder %s21, 0
    %p215 = por %p213, %p214
    %p216 = scmp.ne.s32.totalorder %s204, %s205
    %p217 = scmp.eq.s32.totalorder %s22, 1
    %p218 = por %p216, %p217
    %p220 = scmp.ne.s32.totalorder %s205, %s219
    %p221 = scmp.eq.s32.totalorder %s22, 0
    %p222 = por %p220, %p221
    %s224 = sadd.s32 %s223, 1
    %p227 = scmp.eq.s32.totalorder %s16, 1
    %p228 = scmp.ne.s32.totalorder %s223, %s225
    %p229 = scmp.eq.s32.totalorder %s16, 0
    %p230 = por %p228, %p229
    %p231 = scmp.ne.s32.totalorder %s223, %s225
    %p232 = scmp.eq.s32.totalorder %s21, 1
    %p233 = por %p231, %p232
    %p234 = scmp.ne.s32.totalorder %s225, %s226
    %p235 = scmp.eq.s32.totalorder %s21, 0
    %p236 = por %p234, %p235
    %p237 = scmp.ne.s32.totalorder %s225, %s226
    %p238 = scmp.eq.s32.totalorder %s22, 1
    %p239 = por %p237, %p238
    %p241 = scmp.ne.s32.totalorder %s226, %s240
    %p242 = scmp.eq.s32.totalorder %s22, 0
    %p243 = por %p241, %p242
    %s244 = ssub.s32 %s16, %s23
    %p245 = scmp.eq.s32.totalorder %s244, 0
    %s247 = sadd.s32 %s246, 1
    %s248 = scalar_select %p245, %s246, %s247
    %p251 = pneg %p245
    %p252 = scmp.eq.s32.totalorder %s16, 1
    %p253 = por %p251, %p252
    %p254 = scmp.ne.s32.totalorder %s246, %s249
    %p255 = scmp.eq.s32.totalorder %s16, 0
    %p256 = por %p254, %p255
    %p257 = scmp.ne.s32.totalorder %s246, %s249
    %p258 = scmp.eq.s32.totalorder %s21, 1
    %p259 = por %p257, %p258
    %p260 = scmp.ne.s32.totalorder %s249, %s250
    %p261 = scmp.eq.s32.totalorder %s21, 0
    %p262 = por %p260, %p261
    %p263 = scmp.ne.s32.totalorder %s249, %s250
    %p264 = scmp.eq.s32.totalorder %s22, 1
    %p265 = por %p263, %p264
    %p267 = scmp.ne.s32.totalorder %s250, %s266
    %p268 = scmp.eq.s32.totalorder %s22, 0
    %p269 = por %p267, %p268
    %p270 = scmp.le.s32.totalorder 1, %s16
    %p271 = scmp.lt.s32.totalorder %s16, 3
    %p272 = pnand %p270, %p271
    %p273 = pneg %p272
    // Predicated region
    $region9: #{_liseq_fused.1} parent=5 // pred_check
      _
    $region10: #{_liseq_fused.1} parent=5 // pred_check_branch
      %275 = sbr.rel (%p272) target = $region12
    $region11: #{_liseq_fused.1} parent=5 // pred_region
      %s276 = ssub.s32 %s16, 1
      // Predicated region
      $region13: #{_liseq_fused.1} parent=11 // pred_check
        %p277 = pneg %p89
      $region14: #{_liseq_fused.1} parent=11 // pred_check_branch
        %279 = sbr.rel (%p277) target = $region16
      $region15: #{_liseq_fused.1} parent=11 // pred_region
        _
      $region16: #{_liseq_fused.1} parent=11 // pred_fallthru
        _
      // Predicated region
      $region17: #{_liseq_fused.1} parent=11 // pred_check
        %p280 = pneg %p110
      $region18: #{_liseq_fused.1} parent=11 // pred_check_branch
        %282 = sbr.rel (%p280) target = $region20
      $region19: #{_liseq_fused.1} parent=11 // pred_region
        _
      $region20: #{_liseq_fused.1} parent=11 // pred_fallthru
        _
      // Predicated region
      $region21: #{_liseq_fused.1} parent=11 // pred_check
        %p283 = pneg %p131
      $region22: #{_liseq_fused.1} parent=11 // pred_check_branch
        %285 = sbr.rel (%p283) target = $region24
      $region23: #{_liseq_fused.1} parent=11 // pred_region
        _
      $region24: #{_liseq_fused.1} parent=11 // pred_fallthru
        _
      // Predicated region
      $region25: #{_liseq_fused.1} parent=11 // pred_check
        %p286 = pneg %p152
      $region26: #{_liseq_fused.1} parent=11 // pred_check_branch
        %288 = sbr.rel (%p286) target = $region28
      $region27: #{_liseq_fused.1} parent=11 // pred_region
        _
      $region28: #{_liseq_fused.1} parent=11 // pred_fallthru
        _
      // Predicated region
      $region29: #{_liseq_fused.1} parent=11 // pred_check
        %p289 = pneg %p173
      $region30: #{_liseq_fused.1} parent=11 // pred_check_branch
        %291 = sbr.rel (%p289) target = $region32
      $region31: #{_liseq_fused.1} parent=11 // pred_region
        _
      $region32: #{_liseq_fused.1} parent=11 // pred_fallthru
        _
      // Predicated region
      $region33: #{_liseq_fused.1} parent=11 // pred_check
        %p292 = pneg %p194
      $region34: #{_liseq_fused.1} parent=11 // pred_check_branch
        %294 = sbr.rel (%p292) target = $region36
      $region35: #{_liseq_fused.1} parent=11 // pred_region
        _
      $region36: #{_liseq_fused.1} parent=11 // pred_fallthru
        _
      // Predicated region
      $region37: #{_liseq_fused.1} parent=11 // pred_check
        %p295 = pneg %p215
      $region38: #{_liseq_fused.1} parent=11 // pred_check_branch
        %297 = sbr.rel (%p295) target = $region40
      $region39: #{_liseq_fused.1} parent=11 // pred_region
        _
      $region40: #{_liseq_fused.1} parent=11 // pred_fallthru
        _
      // Predicated region
      $region41: #{_liseq_fused.1} parent=11 // pred_check
        %p298 = pneg %p236
      $region42: #{_liseq_fused.1} parent=11 // pred_check_branch
        %300 = sbr.rel (%p298) target = $region44
      $region43: #{_liseq_fused.1} parent=11 // pred_region
        _
      $region44: #{_liseq_fused.1} parent=11 // pred_fallthru
        _
    $region12: #{_liseq_fused.1} parent=5 // pred_fallthru
      _
    %p301 = scmp.lt.s32.totalorder %s16, 2
    // Predicated region
    $region45: #{_liseq_fused.1} parent=5 // pred_check
      %p302 = pneg %p301
    $region46: #{_liseq_fused.1} parent=5 // pred_check_branch
      %304 = sbr.rel (%p302) target = $region48
    $region47: #{_liseq_fused.1} parent=5 // pred_region
      // Predicated region
      $region49: #{_liseq_fused.1} parent=47 // pred_check
        %p305 = pneg %p36
      $region50: #{_liseq_fused.1} parent=47 // pred_check_branch
        %307 = sbr.rel (%p305) target = $region52
      $region51: #{_liseq_fused.1} parent=47 // pred_region
        %s308 = smul.u32 16, %s16
        %p309 = scmp.lt.s32.totalorder %s308, 31
        %s310 = scalar_select %p309, %s308, 31
        %s311 = smul.addr %s310, 8
        %s312 = scalar_lea.vmem %s0, %s311
        %s313 = smul.u32 16, %s16
      $region52: #{_liseq_fused.1} parent=47 // pred_fallthru
        _
      // Predicated region
      $region53: #{_liseq_fused.1} parent=47 // pred_check
        %p314 = pneg %p62
      $region54: #{_liseq_fused.1} parent=47 // pred_check_branch
        %316 = sbr.rel (%p314) target = $region56
      $region55: #{_liseq_fused.1} parent=47 // pred_region
        %s317 = smul.u32 16, %s16
        %p318 = scmp.lt.s32.totalorder %s317, 31
        %s319 = scalar_select %p318, %s317, 31
        %s320 = smul.addr %s319, 8
        %s321 = scalar_lea.vmem %s1, %s320
        %s322 = smul.u32 16, %s16
      $region56: #{_liseq_fused.1} parent=47 // pred_fallthru
        _
    $region48: #{_liseq_fused.1} parent=5 // pred_fallthru
      _
    %p323 = scmp.le.s32.totalorder 1, %s16
    %p324 = scmp.lt.s32.totalorder %s16, 3
    %p325 = pnand %p323, %p324
    %p326 = pneg %p325
    // Predicated region
    $region57: #{_liseq_fused.1} parent=5 // pred_check
      _
    $region58: #{_liseq_fused.1} parent=5 // pred_check_branch
      %328 = sbr.rel (%p325) target = $region60
    $region59: #{_liseq_fused.1} parent=5 // pred_region
      %s329 = ssub.s32 %s16, 1
      %s330 = smul.u32 16, %s21
      %p331 = scmp.lt.s32.totalorder %s330, 31
      %s332 = scalar_select %p331, %s330, 31
      %s333 = smul.addr %s332, 8
      %s334 = scalar_lea.vmem %s0, %s333
      %p335 = pneg %p42
      %p336 = pneg %p39
      %s337 = smul.u32 16, %s21
      %p338 = scmp.lt.s32.totalorder %s337, 31
      %s339 = scalar_select %p338, %s337, 31
      %s340 = smul.addr %s339, 8
      %s341 = scalar_lea.vmem %s1, %s340
      %p342 = pneg %p68
      %p343 = pneg %p65
      %p344 = pneg %p89
      %p345 = pneg %p86
      %p346 = pneg %p110
      %p347 = pneg %p107
      %p348 = pneg %p131
      %p349 = pneg %p128
      %p350 = pneg %p152
      %p351 = pneg %p149
      %p352 = pneg %p173
      %p353 = pneg %p170
      %p354 = pneg %p194
      %p355 = pneg %p191
      %p356 = pneg %p215
      %p357 = pneg %p212
      %p358 = pneg %p236
      %p359 = pneg %p233
      %p360 = pneg %p262
      %p361 = pneg %p259
      %s362 = smul.u32 16, %s21
      %p363 = scmp.lt.s32.totalorder %s362, 31
      %s364 = scalar_select %p363, %s362, 31
      %s365 = smul.addr %s364, 8
      %s366 = scalar_lea.vmem %s10, %s365
      %s367 = smul.u32 16, %s21
      %p368 = scmp.lt.s32.totalorder %s367, 31
      %s369 = scalar_select %p368, %s367, 31
      %s370 = smul.addr %s369, 8
      %s371 = scalar_lea.vmem %s0, %s370
      %s372 = smul.u32 16, %s21
      %s373 = smul.u32 16, %s21
      %p374 = scmp.lt.s32.totalorder %s373, 31
      %s375 = scalar_select %p374, %s373, 31
      %s376 = smul.addr %s375, 8
      %s377 = scalar_lea.vmem %s1, %s376
      %s378 = smul.u32 16, %s21
      %s379 = smul.u32 16, %s21
      %p380 = scmp.lt.s32.totalorder %s379, 31
      %s381 = scalar_select %p380, %s379, 31
      %s382 = smul.addr %s381, 8
      %s383 = scalar_lea.vmem %s10, %s382
      %s384 = smul.u32 16, %s21
      %v385 = vld [vmem:[%s377] sm:$0xff]
      %v386 = vld [vmem:[%s377 + $0x8] sm:$0xff]
      %v387 = vld [vmem:[%s377 + $0x10] sm:$0xff]
      %v388 = vld [vmem:[%s377 + $0x18] sm:$0xff]
      %v389 = vld [vmem:[%s377 + $0x20] sm:$0xff]
      %v390 = vld [vmem:[%s377 + $0x28] sm:$0xff]
      %v391 = vld [vmem:[%s377 + $0x30] sm:$0xff]
      %v392 = vld [vmem:[%s377 + $0x38] sm:$0xff]
      %v393 = vld [vmem:[%s377 + $0x40] sm:$0xff]
      %v394 = vld [vmem:[%s377 + $0x48] sm:$0xff]
      %v395 = vld [vmem:[%s377 + $0x50] sm:$0xff]
      %v396 = vld [vmem:[%s377 + $0x58] sm:$0xff]
      %v397 = vld [vmem:[%s377 + $0x60] sm:$0xff]
      %v398 = vld [vmem:[%s377 + $0x68] sm:$0xff]
      %v399 = vld [vmem:[%s377 + $0x70] sm:$0xff]
      %v400 = vld [vmem:[%s377 + $0x78] sm:$0xff]
      %v401 = vld [vmem:[%s371] sm:$0xff]
      %v402 = vld [vmem:[%s371 + $0x8] sm:$0xff]
      %v403 = vld [vmem:[%s371 + $0x10] sm:$0xff]
      %v404 = vld [vmem:[%s371 + $0x18] sm:$0xff]
      %v405 = vld [vmem:[%s371 + $0x20] sm:$0xff]
      %v406 = vld [vmem:[%s371 + $0x28] sm:$0xff]
      %v407 = vld [vmem:[%s371 + $0x30] sm:$0xff]
      %v408 = vld [vmem:[%s371 + $0x38] sm:$0xff]
      %v409 = vld [vmem:[%s371 + $0x40] sm:$0xff]
      %v410 = vld [vmem:[%s371 + $0x48] sm:$0xff]
      %v411 = vld [vmem:[%s371 + $0x50] sm:$0xff]
      %v412 = vld [vmem:[%s371 + $0x58] sm:$0xff]
      %v413 = vld [vmem:[%s371 + $0x60] sm:$0xff]
      %v414 = vld [vmem:[%s371 + $0x68] sm:$0xff]
      %v415 = vld [vmem:[%s371 + $0x70] sm:$0xff]
      %v416 = vld [vmem:[%s371 + $0x78] sm:$0xff]
      %v417 = vld [vmem:[%s2] sm:$0xff]
      %v418 = vld [vmem:[%s2 + $0x8] sm:$0xff]
      %v419 = vld [vmem:[%s2 + $0x10] sm:$0xff]
      %v420 = vld [vmem:[%s2 + $0x18] sm:$0xff]
      %v421 = vld [vmem:[%s2 + $0x20] sm:$0xff]
      %v422 = vld [vmem:[%s2 + $0x28] sm:$0xff]
      %v423 = vld [vmem:[%s2 + $0x30] sm:$0xff]
      %v424 = vld [vmem:[%s2 + $0x38] sm:$0xff]
      %v425 = vld [vmem:[%s2 + $0x40] sm:$0xff]
      %v426 = vld [vmem:[%s2 + $0x48] sm:$0xff]
      %v427 = vld [vmem:[%s2 + $0x50] sm:$0xff]
      %v428 = vld [vmem:[%s2 + $0x58] sm:$0xff]
      %v429 = vld [vmem:[%s2 + $0x60] sm:$0xff]
      %v430 = vld [vmem:[%s2 + $0x68] sm:$0xff]
      %v431 = vld [vmem:[%s2 + $0x70] sm:$0xff]
      %v432 = vld [vmem:[%s2 + $0x78] sm:$0xff]
      %v433 = vld [vmem:[%s3] sm:$0x1]
      %v435 = vperm.slane %v433, 0
      %437 = vmatpush.msra.mxu0 %v432
      %438 = vmatpush.msra.mxu0 %v431
      %439 = vmatpush.msra.mxu0 %v430
      %440 = vmatpush.msra.mxu0 %v429
      %441 = vmatpush.msra.mxu0 %v428
      %442 = vmatpush.msra.mxu0 %v427
      %443 = vmatpush.msra.mxu0 %v426
      %444 = vmatpush.msra.mxu0 %v425
      %445 = vmatpush.msra.mxu0 %v424
      %446 = vmatpush.msra.mxu0 %v423
      %447 = vmatpush.msra.mxu0 %v422
      %448 = vmatpush.msra.mxu0 %v421
      %449 = vmatpush.msra.mxu0 %v420
      %450 = vmatpush.msra.mxu0 %v419
      %451 = vmatpush.msra.mxu0 %v418
      %452 = vmatpush.msra.mxu0 %v417
      %453 = vmatmul.f32.gmra.mxu0 %v385
      %v454 = vpop.f32.mrf.mxu0
      %v455 = vadd.f32 %v435, %v454
      %456 = vmatmul.f32.gmra.mxu0 %v386
      %v457 = vpop.f32.mrf.mxu0
      %v458 = vadd.f32 %v435, %v457
      %459 = vmatmul.f32.gmra.mxu0 %v387
      %v460 = vpop.f32.mrf.mxu0
      %v461 = vadd.f32 %v435, %v460
      %462 = vmatmul.f32.gmra.mxu0 %v388
      %v463 = vpop.f32.mrf.mxu0
      %v464 = vadd.f32 %v435, %v463
      %465 = vmatmul.f32.gmra.mxu0 %v389
      %v466 = vpop.f32.mrf.mxu0
      %v467 = vadd.f32 %v435, %v466
      %468 = vmatmul.f32.gmra.mxu0 %v390
      %v469 = vpop.f32.mrf.mxu0
      %v470 = vadd.f32 %v435, %v469
      %471 = vmatmul.f32.gmra.mxu0 %v391
      %v472 = vpop.f32.mrf.mxu0
      %v473 = vadd.f32 %v435, %v472
      %474 = vmatmul.f32.gmra.mxu0 %v392
      %v475 = vpop.f32.mrf.mxu0
      %v476 = vadd.f32 %v435, %v475
      %477 = vmatmul.f32.gmra.mxu0 %v393
      %v478 = vpop.f32.mrf.mxu0
      %v479 = vadd.f32 %v435, %v478
      %480 = vmatmul.f32.gmra.mxu0 %v394
      %v481 = vpop.f32.mrf.mxu0
      %v482 = vadd.f32 %v435, %v481
      %483 = vmatmul.f32.gmra.mxu0 %v395
      %v484 = vpop.f32.mrf.mxu0
      %v485 = vadd.f32 %v435, %v484
      %486 = vmatmul.f32.gmra.mxu0 %v396
      %v487 = vpop.f32.mrf.mxu0
      %v488 = vadd.f32 %v435, %v487
      %489 = vmatmul.f32.gmra.mxu0 %v397
      %v490 = vpop.f32.mrf.mxu0
      %v491 = vadd.f32 %v435, %v490
      %492 = vmatmul.f32.gmra.mxu0 %v398
      %v493 = vpop.f32.mrf.mxu0
      %v494 = vadd.f32 %v435, %v493
      %495 = vmatmul.f32.gmra.mxu0 %v399
      %v496 = vpop.f32.mrf.mxu0
      %v497 = vadd.f32 %v435, %v496
      %498 = vmatmul.f32.gmra.mxu0 %v400
      %v499 = vpop.f32.mrf.mxu0
      %v500 = vadd.f32 %v435, %v499
      %501 = vdwg.mxu0
      %v502 = vmul.f32 %v401, %v455
      %v503 = vmul.f32 %v402, %v458
      %v504 = vmul.f32 %v403, %v461
      %v505 = vmul.f32 %v404, %v464
      %v506 = vmul.f32 %v405, %v467
      %v507 = vmul.f32 %v406, %v470
      %v508 = vmul.f32 %v407, %v473
      %v509 = vmul.f32 %v408, %v476
      %v510 = vmul.f32 %v409, %v479
      %v511 = vmul.f32 %v410, %v482
      %v512 = vmul.f32 %v411, %v485
      %v513 = vmul.f32 %v412, %v488
      %v514 = vmul.f32 %v413, %v491
      %v515 = vmul.f32 %v414, %v494
      %v516 = vmul.f32 %v415, %v497
      %v517 = vmul.f32 %v416, %v500
      %v518 = vld [vmem:[%s4] sm:$0xff]
      %v519 = vld [vmem:[%s4 + $0x8] sm:$0xff]
      %v520 = vld [vmem:[%s4 + $0x10] sm:$0xff]
      %v521 = vld [vmem:[%s4 + $0x18] sm:$0xff]
      %v522 = vld [vmem:[%s4 + $0x20] sm:$0xff]
      %v523 = vld [vmem:[%s4 + $0x28] sm:$0xff]
      %v524 = vld [vmem:[%s4 + $0x30] sm:$0xff]
      %v525 = vld [vmem:[%s4 + $0x38] sm:$0xff]
      %v526 = vld [vmem:[%s4 + $0x40] sm:$0xff]
      %v527 = vld [vmem:[%s4 + $0x48] sm:$0xff]
      %v528 = vld [vmem:[%s4 + $0x50] sm:$0xff]
      %v529 = vld [vmem:[%s4 + $0x58] sm:$0xff]
      %v530 = vld [vmem:[%s4 + $0x60] sm:$0xff]
      %v531 = vld [vmem:[%s4 + $0x68] sm:$0xff]
      %v532 = vld [vmem:[%s4 + $0x70] sm:$0xff]
      %v533 = vld [vmem:[%s4 + $0x78] sm:$0xff]
      %v534 = vld [vmem:[%s5] sm:$0x1]
      %v536 = vperm.slane %v534, 0
      %538 = vmatpush.msra.mxu0 %v533
      %539 = vmatpush.msra.mxu0 %v532
      %540 = vmatpush.msra.mxu0 %v531
      %541 = vmatpush.msra.mxu0 %v530
      %542 = vmatpush.msra.mxu0 %v529
      %543 = vmatpush.msra.mxu0 %v528
      %544 = vmatpush.msra.mxu0 %v527
      %545 = vmatpush.msra.mxu0 %v526
      %546 = vmatpush.msra.mxu0 %v525
      %547 = vmatpush.msra.mxu0 %v524
      %548 = vmatpush.msra.mxu0 %v523
      %549 = vmatpush.msra.mxu0 %v522
      %550 = vmatpush.msra.mxu0 %v521
      %551 = vmatpush.msra.mxu0 %v520
      %552 = vmatpush.msra.mxu0 %v519
      %553 = vmatpush.msra.mxu0 %v518
      %554 = vmatmul.f32.gmra.mxu0 %v502
      %v555 = vpop.f32.mrf.mxu0
      %v556 = vadd.f32 %v536, %v555
      %557 = vmatmul.f32.gmra.mxu0 %v503
      %v558 = vpop.f32.mrf.mxu0
      %v559 = vadd.f32 %v536, %v558
      %560 = vmatmul.f32.gmra.mxu0 %v504
      %v561 = vpop.f32.mrf.mxu0
      %v562 = vadd.f32 %v536, %v561
      %563 = vmatmul.f32.gmra.mxu0 %v505
      %v564 = vpop.f32.mrf.mxu0
      %v565 = vadd.f32 %v536, %v564
      %566 = vmatmul.f32.gmra.mxu0 %v506
      %v567 = vpop.f32.mrf.mxu0
      %v568 = vadd.f32 %v536, %v567
      %569 = vmatmul.f32.gmra.mxu0 %v507
      %v570 = vpop.f32.mrf.mxu0
      %v571 = vadd.f32 %v536, %v570
      %572 = vmatmul.f32.gmra.mxu0 %v508
      %v573 = vpop.f32.mrf.mxu0
      %v574 = vadd.f32 %v536, %v573
      %575 = vmatmul.f32.gmra.mxu0 %v509
      %v576 = vpop.f32.mrf.mxu0
      %v577 = vadd.f32 %v536, %v576
      %578 = vmatmul.f32.gmra.mxu0 %v510
      %v579 = vpop.f32.mrf.mxu0
      %v580 = vadd.f32 %v536, %v579
      %581 = vmatmul.f32.gmra.mxu0 %v511
      %v582 = vpop.f32.mrf.mxu0
      %v583 = vadd.f32 %v536, %v582
      %584 = vmatmul.f32.gmra.mxu0 %v512
      %v585 = vpop.f32.mrf.mxu0
      %v586 = vadd.f32 %v536, %v585
      %587 = vmatmul.f32.gmra.mxu0 %v513
      %v588 = vpop.f32.mrf.mxu0
      %v589 = vadd.f32 %v536, %v588
      %590 = vmatmul.f32.gmra.mxu0 %v514
      %v591 = vpop.f32.mrf.mxu0
      %v592 = vadd.f32 %v536, %v591
      %593 = vmatmul.f32.gmra.mxu0 %v515
      %v594 = vpop.f32.mrf.mxu0
      %v595 = vadd.f32 %v536, %v594
      %596 = vmatmul.f32.gmra.mxu0 %v516
      %v597 = vpop.f32.mrf.mxu0
      %v598 = vadd.f32 %v536, %v597
      %599 = vmatmul.f32.gmra.mxu0 %v517
      %v600 = vpop.f32.mrf.mxu0
      %v601 = vadd.f32 %v536, %v600
      %602 = vdwg.mxu0
      %v603 = vld [vmem:[%s6] sm:$0xff]
      %v604 = vld [vmem:[%s6 + $0x8] sm:$0xff]
      %v605 = vld [vmem:[%s6 + $0x10] sm:$0xff]
      %v606 = vld [vmem:[%s6 + $0x18] sm:$0xff]
      %v607 = vld [vmem:[%s6 + $0x20] sm:$0xff]
      %v608 = vld [vmem:[%s6 + $0x28] sm:$0xff]
      %v609 = vld [vmem:[%s6 + $0x30] sm:$0xff]
      %v610 = vld [vmem:[%s6 + $0x38] sm:$0xff]
      %v611 = vld [vmem:[%s6 + $0x40] sm:$0xff]
      %v612 = vld [vmem:[%s6 + $0x48] sm:$0xff]
      %v613 = vld [vmem:[%s6 + $0x50] sm:$0xff]
      %v614 = vld [vmem:[%s6 + $0x58] sm:$0xff]
      %v615 = vld [vmem:[%s6 + $0x60] sm:$0xff]
      %v616 = vld [vmem:[%s6 + $0x68] sm:$0xff]
      %v617 = vld [vmem:[%s6 + $0x70] sm:$0xff]
      %v618 = vld [vmem:[%s6 + $0x78] sm:$0xff]
      %v619 = vld [vmem:[%s7] sm:$0x1]
      %v621 = vperm.slane %v619, 0
      %623 = vmatpush.msra.mxu0 %v618
      %624 = vmatpush.msra.mxu0 %v617
      %625 = vmatpush.msra.mxu0 %v616
      %626 = vmatpush.msra.mxu0 %v615
      %627 = vmatpush.msra.mxu0 %v614
      %628 = vmatpush.msra.mxu0 %v613
      %629 = vmatpush.msra.mxu0 %v612
      %630 = vmatpush.msra.mxu0 %v611
      %631 = vmatpush.msra.mxu0 %v610
      %632 = vmatpush.msra.mxu0 %v609
      %633 = vmatpush.msra.mxu0 %v608
      %634 = vmatpush.msra.mxu0 %v607
      %635 = vmatpush.msra.mxu0 %v606
      %636 = vmatpush.msra.mxu0 %v605
      %637 = vmatpush.msra.mxu0 %v604
      %638 = vmatpush.msra.mxu0 %v603
      %639 = vmatmul.f32.gmra.mxu0 %v385
      %v640 = vpop.f32.mrf.mxu0
      %v641 = vadd.f32 %v621, %v640
      %642 = vmatmul.f32.gmra.mxu0 %v386
      %v643 = vpop.f32.mrf.mxu0
      %v644 = vadd.f32 %v621, %v643
      %645 = vmatmul.f32.gmra.mxu0 %v387
      %v646 = vpop.f32.mrf.mxu0
      %v647 = vadd.f32 %v621, %v646
      %648 = vmatmul.f32.gmra.mxu0 %v388
      %v649 = vpop.f32.mrf.mxu0
      %v650 = vadd.f32 %v621, %v649
      %651 = vmatmul.f32.gmra.mxu0 %v389
      %v652 = vpop.f32.mrf.mxu0
      %v653 = vadd.f32 %v621, %v652
      %654 = vmatmul.f32.gmra.mxu0 %v390
      %v655 = vpop.f32.mrf.mxu0
      %v656 = vadd.f32 %v621, %v655
      %657 = vmatmul.f32.gmra.mxu0 %v391
      %v658 = vpop.f32.mrf.mxu0
      %v659 = vadd.f32 %v621, %v658
      %660 = vmatmul.f32.gmra.mxu0 %v392
      %v661 = vpop.f32.mrf.mxu0
      %v662 = vadd.f32 %v621, %v661
      %663 = vmatmul.f32.gmra.mxu0 %v393
      %v664 = vpop.f32.mrf.mxu0
      %v665 = vadd.f32 %v621, %v664
      %666 = vmatmul.f32.gmra.mxu0 %v394
      %v667 = vpop.f32.mrf.mxu0
      %v668 = vadd.f32 %v621, %v667
      %669 = vmatmul.f32.gmra.mxu0 %v395
      %v670 = vpop.f32.mrf.mxu0
      %v671 = vadd.f32 %v621, %v670
      %672 = vmatmul.f32.gmra.mxu0 %v396
      %v673 = vpop.f32.mrf.mxu0
      %v674 = vadd.f32 %v621, %v673
      %675 = vmatmul.f32.gmra.mxu0 %v397
      %v676 = vpop.f32.mrf.mxu0
      %v677 = vadd.f32 %v621, %v676
      %678 = vmatmul.f32.gmra.mxu0 %v398
      %v679 = vpop.f32.mrf.mxu0
      %v680 = vadd.f32 %v621, %v679
      %681 = vmatmul.f32.gmra.mxu0 %v399
      %v682 = vpop.f32.mrf.mxu0
      %v683 = vadd.f32 %v621, %v682
      %684 = vmatmul.f32.gmra.mxu0 %v400
      %v685 = vpop.f32.mrf.mxu0
      %v686 = vadd.f32 %v621, %v685
      %687 = vdwg.mxu0
      %v688 = vmul.f32 %v556, %v641
      %v689 = vmul.f32 %v559, %v644
      %v690 = vmul.f32 %v562, %v647
      %v691 = vmul.f32 %v565, %v650
      %v692 = vmul.f32 %v568, %v653
      %v693 = vmul.f32 %v571, %v656
      %v694 = vmul.f32 %v574, %v659
      %v695 = vmul.f32 %v577, %v662
      %v696 = vmul.f32 %v580, %v665
      %v697 = vmul.f32 %v583, %v668
      %v698 = vmul.f32 %v586, %v671
      %v699 = vmul.f32 %v589, %v674
      %v700 = vmul.f32 %v592, %v677
      %v701 = vmul.f32 %v595, %v680
      %v702 = vmul.f32 %v598, %v683
      %v703 = vmul.f32 %v601, %v686
      %v704 = vld [vmem:[%s8] sm:$0xff]
      %v705 = vld [vmem:[%s8 + $0x8] sm:$0xff]
      %v706 = vld [vmem:[%s8 + $0x10] sm:$0xff]
      %v707 = vld [vmem:[%s8 + $0x18] sm:$0xff]
      %v708 = vld [vmem:[%s8 + $0x20] sm:$0xff]
      %v709 = vld [vmem:[%s8 + $0x28] sm:$0xff]
      %v710 = vld [vmem:[%s8 + $0x30] sm:$0xff]
      %v711 = vld [vmem:[%s8 + $0x38] sm:$0xff]
      %v712 = vld [vmem:[%s8 + $0x40] sm:$0xff]
      %v713 = vld [vmem:[%s8 + $0x48] sm:$0xff]
      %v714 = vld [vmem:[%s8 + $0x50] sm:$0xff]
      %v715 = vld [vmem:[%s8 + $0x58] sm:$0xff]
      %v716 = vld [vmem:[%s8 + $0x60] sm:$0xff]
      %v717 = vld [vmem:[%s8 + $0x68] sm:$0xff]
      %v718 = vld [vmem:[%s8 + $0x70] sm:$0xff]
      %v719 = vld [vmem:[%s8 + $0x78] sm:$0xff]
      %v720 = vld [vmem:[%s9] sm:$0x1]
      %v722 = vperm.slane %v720, 0
      %724 = vmatpush.msra.mxu0 %v719
      %725 = vmatpush.msra.mxu0 %v718
      %726 = vmatpush.msra.mxu0 %v717
      %727 = vmatpush.msra.mxu0 %v716
      %728 = vmatpush.msra.mxu0 %v715
      %729 = vmatpush.msra.mxu0 %v714
      %730 = vmatpush.msra.mxu0 %v713
      %731 = vmatpush.msra.mxu0 %v712
      %732 = vmatpush.msra.mxu0 %v711
      %733 = vmatpush.msra.mxu0 %v710
      %734 = vmatpush.msra.mxu0 %v709
      %735 = vmatpush.msra.mxu0 %v708
      %736 = vmatpush.msra.mxu0 %v707
      %737 = vmatpush.msra.mxu0 %v706
      %738 = vmatpush.msra.mxu0 %v705
      %739 = vmatpush.msra.mxu0 %v704
      %740 = vmatmul.f32.gmra.mxu0 %v688
      %v741 = vpop.f32.mrf.mxu0
      %v742 = vadd.f32 %v722, %v741
      %743 = vmatmul.f32.gmra.mxu0 %v689
      %v744 = vpop.f32.mrf.mxu0
      %v745 = vadd.f32 %v722, %v744
      %746 = vmatmul.f32.gmra.mxu0 %v690
      %v747 = vpop.f32.mrf.mxu0
      %v748 = vadd.f32 %v722, %v747
      %749 = vmatmul.f32.gmra.mxu0 %v691
      %v750 = vpop.f32.mrf.mxu0
      %v751 = vadd.f32 %v722, %v750
      %752 = vmatmul.f32.gmra.mxu0 %v692
      %v753 = vpop.f32.mrf.mxu0
      %v754 = vadd.f32 %v722, %v753
      %755 = vmatmul.f32.gmra.mxu0 %v693
      %v756 = vpop.f32.mrf.mxu0
      %v757 = vadd.f32 %v722, %v756
      %758 = vmatmul.f32.gmra.mxu0 %v694
      %v759 = vpop.f32.mrf.mxu0
      %v760 = vadd.f32 %v722, %v759
      %761 = vmatmul.f32.gmra.mxu0 %v695
      %v762 = vpop.f32.mrf.mxu0
      %v763 = vadd.f32 %v722, %v762
      %764 = vmatmul.f32.gmra.mxu0 %v696
      %v765 = vpop.f32.mrf.mxu0
      %v766 = vadd.f32 %v722, %v765
      %767 = vmatmul.f32.gmra.mxu0 %v697
      %v768 = vpop.f32.mrf.mxu0
      %v769 = vadd.f32 %v722, %v768
      %770 = vmatmul.f32.gmra.mxu0 %v698
      %v771 = vpop.f32.mrf.mxu0
      %v772 = vadd.f32 %v722, %v771
      %773 = vmatmul.f32.gmra.mxu0 %v699
      %v774 = vpop.f32.mrf.mxu0
      %v775 = vadd.f32 %v722, %v774
      %776 = vmatmul.f32.gmra.mxu0 %v700
      %v777 = vpop.f32.mrf.mxu0
      %v778 = vadd.f32 %v722, %v777
      %779 = vmatmul.f32.gmra.mxu0 %v701
      %v780 = vpop.f32.mrf.mxu0
      %v781 = vadd.f32 %v722, %v780
      %782 = vmatmul.f32.gmra.mxu0 %v702
      %v783 = vpop.f32.mrf.mxu0
      %v784 = vadd.f32 %v722, %v783
      %785 = vmatmul.f32.gmra.mxu0 %v703
      %v786 = vpop.f32.mrf.mxu0
      %v787 = vadd.f32 %v722, %v786
      %788 = vdwg.mxu0
      %789 = vst [vmem:[%s383] sm:$0xff] %v742
      %790 = vst [vmem:[%s383 + $0x8] sm:$0xff] %v745
      %791 = vst [vmem:[%s383 + $0x10] sm:$0xff] %v748
      %792 = vst [vmem:[%s383 + $0x18] sm:$0xff] %v751
      %793 = vst [vmem:[%s383 + $0x20] sm:$0xff] %v754
      %794 = vst [vmem:[%s383 + $0x28] sm:$0xff] %v757
      %795 = vst [vmem:[%s383 + $0x30] sm:$0xff] %v760
      %796 = vst [vmem:[%s383 + $0x38] sm:$0xff] %v763
      %797 = vst [vmem:[%s383 + $0x40] sm:$0xff] %v766
      %798 = vst [vmem:[%s383 + $0x48] sm:$0xff] %v769
      %799 = vst [vmem:[%s383 + $0x50] sm:$0xff] %v772
      %800 = vst [vmem:[%s383 + $0x58] sm:$0xff] %v775
      %801 = vst [vmem:[%s383 + $0x60] sm:$0xff] %v778
      %802 = vst [vmem:[%s383 + $0x68] sm:$0xff] %v781
      %803 = vst [vmem:[%s383 + $0x70] sm:$0xff] %v784
      %804 = vst [vmem:[%s383 + $0x78] sm:$0xff] %v787
      %s805 = smul.u32 16, %s21
      %p806 = scmp.lt.s32.totalorder %s805, 31
      %s807 = scalar_select %p806, %s805, 31
      %s808 = smul.addr %s807, 8
      %s809 = scalar_lea.vmem %s10, %s808
      // Predicated region
      $region61: #{_liseq_fused.1} parent=59 // pred_check
        %p810 = pneg %p259
      $region62: #{_liseq_fused.1} parent=59 // pred_check_branch
        %812 = sbr.rel (%p810) target = $region64
      $region63: #{_liseq_fused.1} parent=59 // pred_region
        %s813 = smul.u32 16, %s21
      $region64: #{_liseq_fused.1} parent=59 // pred_fallthru
        _
    $region60: #{_liseq_fused.1} parent=5 // pred_fallthru
      _
    %p814 = scmp.le.s32.totalorder 2, %s16
    // Predicated region
    $region65: #{_liseq_fused.1} parent=5 // pred_check
      %p815 = pneg %p814
    $region66: #{_liseq_fused.1} parent=5 // pred_check_branch
      %817 = sbr.rel (%p815) target = $region68
    $region67: #{_liseq_fused.1} parent=5 // pred_region
      %s818 = ssub.s32 %s16, 2
      // Predicated region
      $region69: #{_liseq_fused.1} parent=67 // pred_check
        %p819 = pneg %p265
      $region70: #{_liseq_fused.1} parent=67 // pred_check_branch
        %821 = sbr.rel (%p819) target = $region72
      $region71: #{_liseq_fused.1} parent=67 // pred_region
        %s822 = smul.u32 16, %s22
        %p823 = scmp.lt.s32.totalorder %s822, 31
        %s824 = scalar_select %p823, %s822, 31
        %s825 = smul.addr %s824, 8
        %s826 = scalar_lea.vmem %s10, %s825
      $region72: #{_liseq_fused.1} parent=67 // pred_fallthru
        _
    $region68: #{_liseq_fused.1} parent=5 // pred_fallthru
      _
  $region6: #{_liseq_fused.1} parent=0 // loop_footer
    %s20 = sadd.s32 1, %s16
  $region7: #{_liseq_fused.1} parent=0 // loop_footer_branch
    %15 = sbr.rel target = $region3
  $region8: #{_liseq_fused.1} parent=0 // loop_exit
    _

</llo_original>
